<compile_context>
chip_gen: v7x
topology: tpu7x:2x2x1
jax: 0.10.0
libtpu: 0.0.40
codegen_flags: <defaults>
</compile_context>

<pallas_src>
import functools

import jax
import jax.numpy as jnp
from jax.experimental import pallas as pl
from jax.experimental.pallas import tpu as pltpu


def _round_up(n, m):
    return ((n + m - 1) // m) * m


def _mlp_kernel(
    x_ref,
    w1_ref, s1_ref, t1_ref,
    w2_ref, s2_ref, t2_ref,
    w3_ref, s3_ref, t3_ref,
    w4_ref, b4_ref,
    w5_ref, b5_ref,
    out_ref,
):
    """Fused forward: (Linear -> BN(eval) -> ReLU) x3 -> Linear+ReLU -> Linear.

    Weights are bf16 (in, out); activations cast to bf16 before each MXU dot,
    accumulation and epilogues in f32. Linear biases of layers 1-3 are already
    folded into the BN shift t{1,2,3}.
    """
    f32 = jnp.float32
    bf16 = jnp.bfloat16

    h = x_ref[...].astype(bf16)                                    # (TB, IN_PAD)

    # fc1 + folded (bias + BN eval) + relu
    h = jnp.dot(h, w1_ref[...], preferred_element_type=f32)
    h = jnp.maximum(h * s1_ref[...] + t1_ref[...], 0.0)

    # fc2 + folded (bias + BN eval) + relu
    h = jnp.dot(h.astype(bf16), w2_ref[...], preferred_element_type=f32)
    h = jnp.maximum(h * s2_ref[...] + t2_ref[...], 0.0)

    # fc3 + folded (bias + BN eval) + relu
    h = jnp.dot(h.astype(bf16), w3_ref[...], preferred_element_type=f32)
    h = jnp.maximum(h * s3_ref[...] + t3_ref[...], 0.0)

    # fc4 + relu
    h = jnp.dot(h.astype(bf16), w4_ref[...], preferred_element_type=f32)
    h = jnp.maximum(h + b4_ref[...], 0.0)

    # fc5 (logits, lane-padded to 128)
    out_ref[...] = (
        jnp.dot(h.astype(bf16), w5_ref[...], preferred_element_type=f32)
        + b5_ref[...]
    )


_WEIGHT_KEYS = (
    "w1", "s1", "t1",
    "w2", "s2", "t2",
    "w3", "s3", "t3",
    "w4", "b4",
    "w5", "b5",
)


@functools.partial(jax.jit, static_argnames=("tile_b",))
def _forward_padded(x_pad, weights, *, tile_b):
    """x_pad: (Bp, IN_PAD) f32, Bp % tile_b == 0. Returns (Bp, OUT_PAD) f32."""
    bp, in_pad = x_pad.shape
    out_pad = weights[-2].shape[1]  # w5: (64, OUT_PAD)
    grid = (bp // tile_b,)

    def _resident(shape):
        # Whole-array block; constant index_map => stays in VMEM across steps.
        return pl.BlockSpec(shape, lambda i, _s=shape: tuple(0 for _ in _s))

    in_specs = [pl.BlockSpec((tile_b, in_pad), lambda i: (i, 0))]
    in_specs += [_resident(w.shape) for w in weights]
    out_specs = pl.BlockSpec((tile_b, out_pad), lambda i: (i, 0))

    return pl.pallas_call(
        _mlp_kernel,
        out_shape=jax.ShapeDtypeStruct((bp, out_pad), jnp.float32),
        grid=grid,
        in_specs=in_specs,
        out_specs=out_specs,
        compiler_params=pltpu.CompilerParams(
            dimension_semantics=("parallel",),
        ),
    )(x_pad, *weights)


def chatbot_forward(x, params, *, tile_b=128):
    """x: (B, input_size) or (input_size,) float32. Returns (B, output_size) f32."""
    if x.ndim == 1:
        x = x[None, :]
    b, in_features = x.shape
    in_pad = params["w1"].shape[0]
    out_size = params["output_size"]

    # Effective batch tile: >= 8 sublanes, <= tile_b rows.
    eff_tile = max(8, min(tile_b, _round_up(b, 8)))
    bp = _round_up(b, eff_tile)

    x_pad = jnp.zeros((bp, in_pad), jnp.float32)
    x_pad = x_pad.at[:b, :in_features].set(x.astype(jnp.float32))

    weights = tuple(params[k] for k in _WEIGHT_KEYS)
    out = _forward_padded(x_pad, weights, tile_b=eff_tile)
    return out[:b, :out_size]


def init_params(key, input_size, output_size, weight_dtype=jnp.bfloat16):
    """Parameters mirroring ChatbotModel (eval mode), pre-transposed & pre-folded.

    - Linear weights stored as (in, out) so the kernel does plain x @ W.
    - BN (eval) folded to scale s = gamma/sqrt(var+eps), shift t = beta - mean*s;
      the Linear bias of layers 1-3 is additionally folded: t' = b*s + t.
    - w1 zero-padded along the input dim to a multiple of 128; w5/b5 zero-padded
      along the output dim to 128 lanes (sliced off on the host).
    """
    dims = [input_size, 512, 256, 128, 64, output_size]
    in_pad = _round_up(input_size, 128)
    out_pad = _round_up(output_size, 128)
    eps = 1e-5

    keys = jax.random.split(key, 10)
    ws, bs = [], []
    for i in range(5):
        fan_in, fan_out = dims[i], dims[i + 1]
        bound = float(fan_in) ** -0.5
        ws.append(jax.random.uniform(keys[2 * i], (fan_in, fan_out),
                                     jnp.float32, -bound, bound))
        bs.append(jax.random.uniform(keys[2 * i + 1], (fan_out,),
                                     jnp.float32, -bound, bound))

    params = {"input_size": input_size, "output_size": output_size}

    # BN eval-mode fold (init: gamma=1, beta=0, mean=0, var=1) + linear-bias fold.
    for layer, feat in zip((1, 2, 3), (512, 256, 128)):
        gamma = jnp.ones((feat,), jnp.float32)
        beta = jnp.zeros((feat,), jnp.float32)
        mean = jnp.zeros((feat,), jnp.float32)
        var = jnp.ones((feat,), jnp.float32)
        s = gamma / jnp.sqrt(var + eps)
        t = beta - mean * s
        t_folded = bs[layer - 1] * s + t
        params[f"s{layer}"] = s[None, :]
        params[f"t{layer}"] = t_folded[None, :]

    w1 = jnp.zeros((in_pad, 512), jnp.float32).at[:input_size].set(ws[0])
    w5 = jnp.zeros((64, out_pad), jnp.float32).at[:, :output_size].set(ws[4])
    b5 = jnp.zeros((out_pad,), jnp.float32).at[:output_size].set(bs[4])

    params["w1"] = w1.astype(weight_dtype)
    params["w2"] = ws[1].astype(weight_dtype)
    params["w3"] = ws[2].astype(weight_dtype)
    params["w4"] = ws[3].astype(weight_dtype)
    params["w5"] = w5.astype(weight_dtype)
    params["b4"] = bs[3][None, :].astype(jnp.float32)
    params["b5"] = b5[None, :].astype(jnp.float32)
    return params


def reference_forward(x, params):
    """Pure-JAX reference using the same padded params / mixed precision."""
    if x.ndim == 1:
        x = x[None, :]
    b, in_features = x.shape
    in_pad = params["w1"].shape[0]
    xp = jnp.zeros((b, in_pad), jnp.float32).at[:, :in_features].set(
        x.astype(jnp.float32))

    def dot_bf16(a, w):
        return jnp.dot(a.astype(jnp.bfloat16), w,
                       preferred_element_type=jnp.float32)

    h = jnp.maximum(dot_bf16(xp, params["w1"]) * params["s1"] + params["t1"], 0.0)
    h = jnp.maximum(dot_bf16(h, params["w2"]) * params["s2"] + params["t2"], 0.0)
    h = jnp.maximum(dot_bf16(h, params["w3"]) * params["s3"] + params["t3"], 0.0)
    h = jnp.maximum(dot_bf16(h, params["w4"]) + params["b4"], 0.0)
    out = dot_bf16(h, params["w5"]) + params["b5"]
    return out[:, :params["output_size"]]


if __name__ == "__main__":
    key = jax.random.PRNGKey(0)
    pkey, xkey = jax.random.split(key)

    input_size = 32   # small bag-of-words vocab
    output_size = 8   # number of intents
    batch = 2

    params = init_params(pkey, input_size, output_size)
    x = jax.random.uniform(xkey, (batch, input_size), jnp.float32)

    out = chatbot_forward(x, params)
    out = jax.block_until_ready(out)

    ref = reference_forward(x, params)
    assert out.shape == (batch, output_size), out.shape
    assert jnp.allclose(out, ref, atol=1e-2, rtol=1e-2), "mismatch vs reference"

    print("KERNEL_OK")
</pallas_src>

<mosaic_0001>
module attributes {stable_mosaic.version = 11 : i64} {
  func.func @_mlp_kernel(%arg0: i32, %arg1: memref<8x128xf32, #tpu.memory_space<vmem>>, %arg2: memref<128x512xbf16, #tpu.memory_space<vmem>>, %arg3: memref<1x512xf32, #tpu.memory_space<vmem>>, %arg4: memref<1x512xf32, #tpu.memory_space<vmem>>, %arg5: memref<512x256xbf16, #tpu.memory_space<vmem>>, %arg6: memref<1x256xf32, #tpu.memory_space<vmem>>, %arg7: memref<1x256xf32, #tpu.memory_space<vmem>>, %arg8: memref<256x128xbf16, #tpu.memory_space<vmem>>, %arg9: memref<1x128xf32, #tpu.memory_space<vmem>>, %arg10: memref<1x128xf32, #tpu.memory_space<vmem>>, %arg11: memref<128x64xbf16, #tpu.memory_space<vmem>>, %arg12: memref<1x64xf32, #tpu.memory_space<vmem>>, %arg13: memref<64x128xbf16, #tpu.memory_space<vmem>>, %arg14: memref<1x128xf32, #tpu.memory_space<vmem>>, %arg15: memref<8x128xf32, #tpu.memory_space<vmem>>) attributes {dimension_semantics = [#tpu.dimension_semantics<parallel>], iteration_bounds = array<i64: 1>, scalar_prefetch = 0 : i64, scratch_operands = 0 : i64, tpu.core_type = #tpu.core_type<tc>, window_params = [{transform_indices = @transform_0, window_bounds = array<i64: 8, 128>}, {pipeline_mode = #tpu.pipeline_mode<synchronous>, transform_indices = @transform_1, window_bounds = array<i64: 128, 512>}, {pipeline_mode = #tpu.pipeline_mode<synchronous>, transform_indices = @transform_2, window_bounds = array<i64: 1, 512>}, {pipeline_mode = #tpu.pipeline_mode<synchronous>, transform_indices = @transform_3, window_bounds = array<i64: 1, 512>}, {pipeline_mode = #tpu.pipeline_mode<synchronous>, transform_indices = @transform_4, window_bounds = array<i64: 512, 256>}, {pipeline_mode = #tpu.pipeline_mode<synchronous>, transform_indices = @transform_5, window_bounds = array<i64: 1, 256>}, {pipeline_mode = #tpu.pipeline_mode<synchronous>, transform_indices = @transform_6, window_bounds = array<i64: 1, 256>}, {pipeline_mode = #tpu.pipeline_mode<synchronous>, transform_indices = @transform_7, window_bounds = array<i64: 256, 128>}, {pipeline_mode = #tpu.pipeline_mode<synchronous>, transform_indices = @transform_8, window_bounds = array<i64: 1, 128>}, {pipeline_mode = #tpu.pipeline_mode<synchronous>, transform_indices = @transform_9, window_bounds = array<i64: 1, 128>}, {pipeline_mode = #tpu.pipeline_mode<synchronous>, transform_indices = @transform_10, window_bounds = array<i64: 128, 64>}, {pipeline_mode = #tpu.pipeline_mode<synchronous>, transform_indices = @transform_11, window_bounds = array<i64: 1, 64>}, {pipeline_mode = #tpu.pipeline_mode<synchronous>, transform_indices = @transform_12, window_bounds = array<i64: 64, 128>}, {pipeline_mode = #tpu.pipeline_mode<synchronous>, transform_indices = @transform_13, window_bounds = array<i64: 1, 128>}, {transform_indices = @transform_14, window_bounds = array<i64: 8, 128>}]} {
    %c0 = arith.constant 0 : index
    %c0_0 = arith.constant 0 : index
    %0 = vector.load %arg1[%c0, %c0_0] : memref<8x128xf32, #tpu.memory_space<vmem>>, vector<8x128xf32>
    %1 = arith.truncf %0 : vector<8x128xf32> to vector<8x128xbf16>
    %c0_1 = arith.constant 0 : index
    %c0_2 = arith.constant 0 : index
    %2 = vector.load %arg2[%c0_1, %c0_2] : memref<128x512xbf16, #tpu.memory_space<vmem>>, vector<128x512xbf16>
    %cst = arith.constant dense<0.000000e+00> : vector<8x512xf32>
    %3 = tpu.matmul %1, %2, %cst {dimension_numbers = #tpu.dot_dimension_numbers<[1], [0], [0], [1], [0, 0, 1, 1], [], []>} : vector<8x128xbf16>, vector<128x512xbf16>, vector<8x512xf32> -> vector<8x512xf32>
    %c0_3 = arith.constant 0 : index
    %c0_4 = arith.constant 0 : index
    %4 = vector.load %arg3[%c0_3, %c0_4] : memref<1x512xf32, #tpu.memory_space<vmem>>, vector<1x512xf32>
    %5 = vector.broadcast %4 : vector<1x512xf32> to vector<8x512xf32>
    %6 = arith.mulf %3, %5 : vector<8x512xf32>
    %c0_5 = arith.constant 0 : index
    %c0_6 = arith.constant 0 : index
    %7 = vector.load %arg4[%c0_5, %c0_6] : memref<1x512xf32, #tpu.memory_space<vmem>>, vector<1x512xf32>
    %8 = vector.broadcast %7 : vector<1x512xf32> to vector<8x512xf32>
    %9 = arith.addf %6, %8 : vector<8x512xf32>
    %cst_7 = arith.constant 0.000000e+00 : f32
    %10 = vector.broadcast %cst_7 : f32 to vector<8x512xf32>
    %11 = arith.maximumf %9, %10 : vector<8x512xf32>
    %12 = arith.truncf %11 : vector<8x512xf32> to vector<8x512xbf16>
    %c0_8 = arith.constant 0 : index
    %c0_9 = arith.constant 0 : index
    %13 = vector.load %arg5[%c0_8, %c0_9] : memref<512x256xbf16, #tpu.memory_space<vmem>>, vector<512x256xbf16>
    %cst_10 = arith.constant dense<0.000000e+00> : vector<8x256xf32>
    %14 = tpu.matmul %12, %13, %cst_10 {dimension_numbers = #tpu.dot_dimension_numbers<[1], [0], [0], [1], [0, 0, 1, 1], [], []>} : vector<8x512xbf16>, vector<512x256xbf16>, vector<8x256xf32> -> vector<8x256xf32>
    %c0_11 = arith.constant 0 : index
    %c0_12 = arith.constant 0 : index
    %15 = vector.load %arg6[%c0_11, %c0_12] : memref<1x256xf32, #tpu.memory_space<vmem>>, vector<1x256xf32>
    %16 = vector.broadcast %15 : vector<1x256xf32> to vector<8x256xf32>
    %17 = arith.mulf %14, %16 : vector<8x256xf32>
    %c0_13 = arith.constant 0 : index
    %c0_14 = arith.constant 0 : index
    %18 = vector.load %arg7[%c0_13, %c0_14] : memref<1x256xf32, #tpu.memory_space<vmem>>, vector<1x256xf32>
    %19 = vector.broadcast %18 : vector<1x256xf32> to vector<8x256xf32>
    %20 = arith.addf %17, %19 : vector<8x256xf32>
    %cst_15 = arith.constant 0.000000e+00 : f32
    %21 = vector.broadcast %cst_15 : f32 to vector<8x256xf32>
    %22 = arith.maximumf %20, %21 : vector<8x256xf32>
    %23 = arith.truncf %22 : vector<8x256xf32> to vector<8x256xbf16>
    %c0_16 = arith.constant 0 : index
    %c0_17 = arith.constant 0 : index
    %24 = vector.load %arg8[%c0_16, %c0_17] : memref<256x128xbf16, #tpu.memory_space<vmem>>, vector<256x128xbf16>
    %cst_18 = arith.constant dense<0.000000e+00> : vector<8x128xf32>
    %25 = tpu.matmul %23, %24, %cst_18 {dimension_numbers = #tpu.dot_dimension_numbers<[1], [0], [0], [1], [0, 0, 1, 1], [], []>} : vector<8x256xbf16>, vector<256x128xbf16>, vector<8x128xf32> -> vector<8x128xf32>
    %c0_19 = arith.constant 0 : index
    %c0_20 = arith.constant 0 : index
    %26 = vector.load %arg9[%c0_19, %c0_20] : memref<1x128xf32, #tpu.memory_space<vmem>>, vector<1x128xf32>
    %27 = vector.broadcast %26 : vector<1x128xf32> to vector<8x128xf32>
    %28 = arith.mulf %25, %27 : vector<8x128xf32>
    %c0_21 = arith.constant 0 : index
    %c0_22 = arith.constant 0 : index
    %29 = vector.load %arg10[%c0_21, %c0_22] : memref<1x128xf32, #tpu.memory_space<vmem>>, vector<1x128xf32>
    %30 = vector.broadcast %29 : vector<1x128xf32> to vector<8x128xf32>
    %31 = arith.addf %28, %30 : vector<8x128xf32>
    %cst_23 = arith.constant 0.000000e+00 : f32
    %32 = vector.broadcast %cst_23 : f32 to vector<8x128xf32>
    %33 = arith.maximumf %31, %32 : vector<8x128xf32>
    %34 = arith.truncf %33 : vector<8x128xf32> to vector<8x128xbf16>
    %c0_24 = arith.constant 0 : index
    %c0_25 = arith.constant 0 : index
    %35 = vector.load %arg11[%c0_24, %c0_25] : memref<128x64xbf16, #tpu.memory_space<vmem>>, vector<128x64xbf16>
    %cst_26 = arith.constant dense<0.000000e+00> : vector<8x64xf32>
    %36 = tpu.matmul %34, %35, %cst_26 {dimension_numbers = #tpu.dot_dimension_numbers<[1], [0], [0], [1], [0, 0, 1, 1], [], []>} : vector<8x128xbf16>, vector<128x64xbf16>, vector<8x64xf32> -> vector<8x64xf32>
    %c0_27 = arith.constant 0 : index
    %c0_28 = arith.constant 0 : index
    %37 = vector.load %arg12[%c0_27, %c0_28] : memref<1x64xf32, #tpu.memory_space<vmem>>, vector<1x64xf32>
    %38 = vector.broadcast %37 : vector<1x64xf32> to vector<8x64xf32>
    %39 = arith.addf %36, %38 : vector<8x64xf32>
    %cst_29 = arith.constant 0.000000e+00 : f32
    %40 = vector.broadcast %cst_29 : f32 to vector<8x64xf32>
    %41 = arith.maximumf %39, %40 : vector<8x64xf32>
    %42 = arith.truncf %41 : vector<8x64xf32> to vector<8x64xbf16>
    %c0_30 = arith.constant 0 : index
    %c0_31 = arith.constant 0 : index
    %43 = vector.load %arg13[%c0_30, %c0_31] : memref<64x128xbf16, #tpu.memory_space<vmem>>, vector<64x128xbf16>
    %cst_32 = arith.constant dense<0.000000e+00> : vector<8x128xf32>
    %44 = tpu.matmul %42, %43, %cst_32 {dimension_numbers = #tpu.dot_dimension_numbers<[1], [0], [0], [1], [0, 0, 1, 1], [], []>} : vector<8x64xbf16>, vector<64x128xbf16>, vector<8x128xf32> -> vector<8x128xf32>
    %c0_33 = arith.constant 0 : index
    %c0_34 = arith.constant 0 : index
    %45 = vector.load %arg14[%c0_33, %c0_34] : memref<1x128xf32, #tpu.memory_space<vmem>>, vector<1x128xf32>
    %46 = vector.broadcast %45 : vector<1x128xf32> to vector<8x128xf32>
    %47 = arith.addf %44, %46 : vector<8x128xf32>
    %c0_35 = arith.constant 0 : index
    %c0_36 = arith.constant 0 : index
    %48 = vector.load %arg15[%c0_35, %c0_36] : memref<8x128xf32, #tpu.memory_space<vmem>>, vector<8x128xf32>
    tpu.vector_store %arg15[%c0_35, %c0_36], %47 {strides = array<i32>} : memref<8x128xf32, #tpu.memory_space<vmem>>, vector<8x128xf32>,
    return
  }
  func.func @transform_0(%arg0: i32) -> (i32, i32) {
    %c0_i32 = arith.constant 0 : i32
    %c0_i32_0 = arith.constant 0 : i32
    return %arg0, %c0_i32 : i32, i32
  }
  func.func @transform_1(%arg0: i32) -> (i32, i32) {
    %c0_i32 = arith.constant 0 : i32
    %c0_i32_0 = arith.constant 0 : i32
    %c0_i32_1 = arith.constant 0 : i32
    return %c0_i32, %c0_i32_0 : i32, i32
  }
  func.func @transform_2(%arg0: i32) -> (i32, i32) {
    %c0_i32 = arith.constant 0 : i32
    %c0_i32_0 = arith.constant 0 : i32
    %c0_i32_1 = arith.constant 0 : i32
    return %c0_i32, %c0_i32_0 : i32, i32
  }
  func.func @transform_3(%arg0: i32) -> (i32, i32) {
    %c0_i32 = arith.constant 0 : i32
    %c0_i32_0 = arith.constant 0 : i32
    %c0_i32_1 = arith.constant 0 : i32
    return %c0_i32, %c0_i32_0 : i32, i32
  }
  func.func @transform_4(%arg0: i32) -> (i32, i32) {
    %c0_i32 = arith.constant 0 : i32
    %c0_i32_0 = arith.constant 0 : i32
    %c0_i32_1 = arith.constant 0 : i32
    return %c0_i32, %c0_i32_0 : i32, i32
  }
  func.func @transform_5(%arg0: i32) -> (i32, i32) {
    %c0_i32 = arith.constant 0 : i32
    %c0_i32_0 = arith.constant 0 : i32
    %c0_i32_1 = arith.constant 0 : i32
    return %c0_i32, %c0_i32_0 : i32, i32
  }
  func.func @transform_6(%arg0: i32) -> (i32, i32) {
    %c0_i32 = arith.constant 0 : i32
    %c0_i32_0 = arith.constant 0 : i32
    %c0_i32_1 = arith.constant 0 : i32
    return %c0_i32, %c0_i32_0 : i32, i32
  }
  func.func @transform_7(%arg0: i32) -> (i32, i32) {
    %c0_i32 = arith.constant 0 : i32
    %c0_i32_0 = arith.constant 0 : i32
    %c0_i32_1 = arith.constant 0 : i32
    return %c0_i32, %c0_i32_0 : i32, i32
  }
  func.func @transform_8(%arg0: i32) -> (i32, i32) {
    %c0_i32 = arith.constant 0 : i32
    %c0_i32_0 = arith.constant 0 : i32
    %c0_i32_1 = arith.constant 0 : i32
    return %c0_i32, %c0_i32_0 : i32, i32
  }
  func.func @transform_9(%arg0: i32) -> (i32, i32) {
    %c0_i32 = arith.constant 0 : i32
    %c0_i32_0 = arith.constant 0 : i32
    %c0_i32_1 = arith.constant 0 : i32
    return %c0_i32, %c0_i32_0 : i32, i32
  }
  func.func @transform_10(%arg0: i32) -> (i32, i32) {
    %c0_i32 = arith.constant 0 : i32
    %c0_i32_0 = arith.constant 0 : i32
    %c0_i32_1 = arith.constant 0 : i32
    return %c0_i32, %c0_i32_0 : i32, i32
  }
  func.func @transform_11(%arg0: i32) -> (i32, i32) {
    %c0_i32 = arith.constant 0 : i32
    %c0_i32_0 = arith.constant 0 : i32
    %c0_i32_1 = arith.constant 0 : i32
    return %c0_i32, %c0_i32_0 : i32, i32
  }
  func.func @transform_12(%arg0: i32) -> (i32, i32) {
    %c0_i32 = arith.constant 0 : i32
    %c0_i32_0 = arith.constant 0 : i32
    %c0_i32_1 = arith.constant 0 : i32
    return %c0_i32, %c0_i32_0 : i32, i32
  }
  func.func @transform_13(%arg0: i32) -> (i32, i32) {
    %c0_i32 = arith.constant 0 : i32
    %c0_i32_0 = arith.constant 0 : i32
    %c0_i32_1 = arith.constant 0 : i32
    return %c0_i32, %c0_i32_0 : i32, i32
  }
  func.func @transform_14(%arg0: i32) -> (i32, i32) {
    %c0_i32 = arith.constant 0 : i32
    %c0_i32_0 = arith.constant 0 : i32
    return %arg0, %c0_i32 : i32, i32
  }
}

</mosaic_0001>

<llo_original>
// kernel: _forward_padded.1
$region0: #{_forward_padded.1}
  #allocation0 [shape = 'u32[]', space=smem, size = 0x4, offset = 0x4, fixed_abs, tag = 'smem constant byte address 0x4 - core index']
  #allocation1 [shape = 'u32[144,128]{1,0:T(1,128)}', space=vmem, size = 0x12000, scoped, tag = 'internal scratch']
  %s0 = inlined_call_operand.vmem [shape: f32[8,128], index: 0, kind: input, shape index: {}]
  %s1 = inlined_call_operand.hbm [shape: bf16[128,512], index: 1, kind: input, shape index: {}]
  %s2 = inlined_call_operand.vmem [shape: f32[1,512], index: 2, kind: input, shape index: {}]
  %s3 = inlined_call_operand.vmem [shape: f32[1,512], index: 3, kind: input, shape index: {}]
  %s4 = inlined_call_operand.hbm [shape: bf16[512,256], index: 4, kind: input, shape index: {}]
  %s5 = inlined_call_operand.vmem [shape: f32[1,256], index: 5, kind: input, shape index: {}]
  %s6 = inlined_call_operand.vmem [shape: f32[1,256], index: 6, kind: input, shape index: {}]
  %s7 = inlined_call_operand.hbm [shape: bf16[256,128], index: 7, kind: input, shape index: {}]
  %s8 = inlined_call_operand.vmem [shape: f32[1,128], index: 8, kind: input, shape index: {}]
  %s9 = inlined_call_operand.vmem [shape: f32[1,128], index: 9, kind: input, shape index: {}]
  %s10 = inlined_call_operand.vmem [shape: bf16[128,64], index: 10, kind: input, shape index: {}]
  %s11 = inlined_call_operand.vmem [shape: f32[1,64], index: 11, kind: input, shape index: {}]
  %s12 = inlined_call_operand.vmem [shape: bf16[64,128], index: 12, kind: input, shape index: {}]
  %s13 = inlined_call_operand.vmem [shape: f32[1,128], index: 13, kind: input, shape index: {}]
  %s14 = inlined_call_operand.hbm [shape: f32[8,128], index: 14, kind: output, shape index: {}]
  %s15 = sld [smem:[#allocation0]]
  $region78: #{_forward_padded.1} parent=0
    _
  %s17 = ssub.s32 1, %s15
  %s18 = scalar_select 0, %s17, %s15
  $region1: #{_forward_padded.1} parent=0
    #allocation2 [shape = 'u8[131072]{0}', space=vmem, size = 0x20000, scoped, tag = 'input window, operand 1, single buffered']
    #allocation3 [shape = 's32[1]{0}', space=sflag, size = 0x4, scoped, tag = 'scoped memory for _forward_padded.1']
    #allocation4 [shape = 's32[1]{0}', space=sflag, size = 0x4, scoped, tag = 'scoped memory for _forward_padded.1']
    #allocation5 [shape = 'u8[262144]{0}', space=vmem, size = 0x40000, scoped, tag = 'input window, operand 4, single buffered']
    #allocation6 [shape = 's32[1]{0}', space=sflag, size = 0x4, scoped, tag = 'scoped memory for _forward_padded.1']
    #allocation7 [shape = 'u8[65536]{0}', space=vmem, size = 0x10000, scoped, tag = 'input window, operand 7, single buffered']
    #allocation8 [shape = 'u8[4096]{0}', space=vmem, size = 0x1000, scoped, tag = 'output window, operand 0, single buffered']
    %19 = vsyncpa [#allocation3], 0
    %20 = vsyncpa [#allocation6], 0
    %21 = vsyncpa [#allocation4], 0
    // Predicated region
    $region2: #{_forward_padded.1} parent=1 // pred_check
      _
    $region3: #{_forward_padded.1} parent=1 // pred_check_branch
      %23 = sbr.rel (0) target = $region5
    $region4: #{_forward_padded.1} parent=1 // pred_region
      _
    $region5: #{_forward_padded.1} parent=1 // pred_fallthru
      _
    // Predicated region
    $region6: #{_forward_padded.1} parent=1 // pred_check
      _
    $region7: #{_forward_padded.1} parent=1 // pred_check_branch
      %25 = sbr.rel (0) target = $region9
    $region8: #{_forward_padded.1} parent=1 // pred_region
      %s27 = ssub.s32 4096, 4096
      %28 = vsyncadd [#allocation3], %s27
      %s29 = sshll.u32 [#allocation2], 4
      %s30 = int_to_ptr.vmem [resolvable:$true] %s29
      %35 = dma.hbm_to_vmem [thread:$0]  %s1, 4096, %s30, [#allocation3], 256, 256, 16
    $region9: #{_forward_padded.1} parent=1 // pred_fallthru
      _
    // Predicated region
    $region10: #{_forward_padded.1} parent=1 // pred_check
      _
    $region11: #{_forward_padded.1} parent=1 // pred_check_branch
      %37 = sbr.rel (0) target = $region13
    $region12: #{_forward_padded.1} parent=1 // pred_region
      _
    $region13: #{_forward_padded.1} parent=1 // pred_fallthru
      _
    // Predicated region
    $region14: #{_forward_padded.1} parent=1 // pred_check
      _
    $region15: #{_forward_padded.1} parent=1 // pred_check_branch
      %39 = sbr.rel (0) target = $region17
    $region16: #{_forward_padded.1} parent=1 // pred_region
      _
    $region17: #{_forward_padded.1} parent=1 // pred_fallthru
      _
    // Predicated region
    $region18: #{_forward_padded.1} parent=1 // pred_check
      _
    $region19: #{_forward_padded.1} parent=1 // pred_check_branch
      %41 = sbr.rel (0) target = $region21
    $region20: #{_forward_padded.1} parent=1 // pred_region
      %s43 = ssub.s32 8192, 8192
      %44 = vsyncadd [#allocation6], %s43
      %s45 = sshll.u32 [#allocation5], 4
      %s46 = int_to_ptr.vmem [resolvable:$true] %s45
      %51 = dma.hbm_to_vmem [thread:$0]  %s4, 8192, %s46, [#allocation6], 128, 128, 8
    $region21: #{_forward_padded.1} parent=1 // pred_fallthru
      _
    // Predicated region
    $region22: #{_forward_padded.1} parent=1 // pred_check
      _
    $region23: #{_forward_padded.1} parent=1 // pred_check_branch
      %53 = sbr.rel (0) target = $region25
    $region24: #{_forward_padded.1} parent=1 // pred_region
      _
    $region25: #{_forward_padded.1} parent=1 // pred_fallthru
      _
    // Predicated region
    $region26: #{_forward_padded.1} parent=1 // pred_check
      _
    $region27: #{_forward_padded.1} parent=1 // pred_check_branch
      %55 = sbr.rel (0) target = $region29
    $region28: #{_forward_padded.1} parent=1 // pred_region
      _
    $region29: #{_forward_padded.1} parent=1 // pred_fallthru
      _
    // Predicated region
    $region30: #{_forward_padded.1} parent=1 // pred_check
      _
    $region31: #{_forward_padded.1} parent=1 // pred_check_branch
      %57 = sbr.rel (0) target = $region33
    $region32: #{_forward_padded.1} parent=1 // pred_region
      %s59 = ssub.s32 2048, 2048
      %60 = vsyncadd [#allocation6], %s59
      %s61 = sshll.u32 [#allocation7], 4
      %s62 = int_to_ptr.vmem [resolvable:$true] %s61
      %67 = dma.hbm_to_vmem [thread:$0]  %s7, 2048, %s62, [#allocation6], 64, 64, 4
    $region33: #{_forward_padded.1} parent=1 // pred_fallthru
      _
    // Predicated region
    $region34: #{_forward_padded.1} parent=1 // pred_check
      _
    $region35: #{_forward_padded.1} parent=1 // pred_check_branch
      %69 = sbr.rel (0) target = $region37
    $region36: #{_forward_padded.1} parent=1 // pred_region
      _
    $region37: #{_forward_padded.1} parent=1 // pred_fallthru
      _
    // Predicated region
    $region38: #{_forward_padded.1} parent=1 // pred_check
      _
    $region39: #{_forward_padded.1} parent=1 // pred_check_branch
      %71 = sbr.rel (0) target = $region41
    $region40: #{_forward_padded.1} parent=1 // pred_region
      _
    $region41: #{_forward_padded.1} parent=1 // pred_fallthru
      _
    // Predicated region
    $region42: #{_forward_padded.1} parent=1 // pred_check
      _
    $region43: #{_forward_padded.1} parent=1 // pred_check_branch
      %73 = sbr.rel (0) target = $region45
    $region44: #{_forward_padded.1} parent=1 // pred_region
      _
    $region45: #{_forward_padded.1} parent=1 // pred_fallthru
      _
    // Predicated region
    $region46: #{_forward_padded.1} parent=1 // pred_check
      _
    $region47: #{_forward_padded.1} parent=1 // pred_check_branch
      %75 = sbr.rel (0) target = $region49
    $region48: #{_forward_padded.1} parent=1 // pred_region
      _
    $region49: #{_forward_padded.1} parent=1 // pred_fallthru
      _
    // Predicated region
    $region50: #{_forward_padded.1} parent=1 // pred_check
      _
    $region51: #{_forward_padded.1} parent=1 // pred_check_branch
      %77 = sbr.rel (0) target = $region53
    $region52: #{_forward_padded.1} parent=1 // pred_region
      _
    $region53: #{_forward_padded.1} parent=1 // pred_fallthru
      _
    // Predicated region
    $region54: #{_forward_padded.1} parent=1 // pred_check
      _
    $region55: #{_forward_padded.1} parent=1 // pred_check_branch
      %79 = sbr.rel (0) target = $region57
    $region56: #{_forward_padded.1} parent=1 // pred_region
      _
    $region57: #{_forward_padded.1} parent=1 // pred_fallthru
      _
    // Predicated region
    $region58: #{_forward_padded.1} parent=1 // pred_check
      _
    $region59: #{_forward_padded.1} parent=1 // pred_check_branch
      %81 = sbr.rel (0) target = $region61
    $region60: #{_forward_padded.1} parent=1 // pred_region
      %82 = dma.done [#allocation3], 4096
    $region61: #{_forward_padded.1} parent=1 // pred_fallthru
      _
    // Predicated region
    $region62: #{_forward_padded.1} parent=1 // pred_check
      _
    $region63: #{_forward_padded.1} parent=1 // pred_check_branch
      %84 = sbr.rel (0) target = $region65
    $region64: #{_forward_padded.1} parent=1 // pred_region
      %85 = dma.done [#allocation6], 8192
    $region65: #{_forward_padded.1} parent=1 // pred_fallthru
      _
    // Predicated region
    $region66: #{_forward_padded.1} parent=1 // pred_check
      _
    $region67: #{_forward_padded.1} parent=1 // pred_check_branch
      %87 = sbr.rel (0) target = $region69
    $region68: #{_forward_padded.1} parent=1 // pred_region
      %88 = dma.done [#allocation6], 2048
    $region69: #{_forward_padded.1} parent=1 // pred_fallthru
      _
    %v90 = vld [vmem:[%s0] sm:$0xff]
    %v91 = vpack.c.bf16 %v90, %v90
    %v92 = vld [vmem:[#allocation2] sm:$0xff]
    %v93 = vld [vmem:[#allocation2 + $0x8] sm:$0xff]
    %v94 = vld [vmem:[#allocation2 + $0x10] sm:$0xff]
    %v95 = vld [vmem:[#allocation2 + $0x18] sm:$0xff]
    %v96 = vld [vmem:[#allocation2 + $0x20] sm:$0xff]
    %v97 = vld [vmem:[#allocation2 + $0x28] sm:$0xff]
    %v98 = vld [vmem:[#allocation2 + $0x30] sm:$0xff]
    %v99 = vld [vmem:[#allocation2 + $0x38] sm:$0xff]
    %v100 = vld [vmem:[#allocation2 + $0x40] sm:$0xff]
    %v101 = vld [vmem:[#allocation2 + $0x48] sm:$0xff]
    %v102 = vld [vmem:[#allocation2 + $0x50] sm:$0xff]
    %v103 = vld [vmem:[#allocation2 + $0x58] sm:$0xff]
    %v104 = vld [vmem:[#allocation2 + $0x60] sm:$0xff]
    %v105 = vld [vmem:[#allocation2 + $0x68] sm:$0xff]
    %v106 = vld [vmem:[#allocation2 + $0x70] sm:$0xff]
    %v107 = vld [vmem:[#allocation2 + $0x78] sm:$0xff]
    %v108 = vld [vmem:[#allocation2 + $0x80] sm:$0xff]
    %v109 = vld [vmem:[#allocation2 + $0x88] sm:$0xff]
    %v110 = vld [vmem:[#allocation2 + $0x90] sm:$0xff]
    %v111 = vld [vmem:[#allocation2 + $0x98] sm:$0xff]
    %v112 = vld [vmem:[#allocation2 + $0xa0] sm:$0xff]
    %v113 = vld [vmem:[#allocation2 + $0xa8] sm:$0xff]
    %v114 = vld [vmem:[#allocation2 + $0xb0] sm:$0xff]
    %v115 = vld [vmem:[#allocation2 + $0xb8] sm:$0xff]
    %v116 = vld [vmem:[#allocation2 + $0xc0] sm:$0xff]
    %v117 = vld [vmem:[#allocation2 + $0xc8] sm:$0xff]
    %v118 = vld [vmem:[#allocation2 + $0xd0] sm:$0xff]
    %v119 = vld [vmem:[#allocation2 + $0xd8] sm:$0xff]
    %v120 = vld [vmem:[#allocation2 + $0xe0] sm:$0xff]
    %v121 = vld [vmem:[#allocation2 + $0xe8] sm:$0xff]
    %v122 = vld [vmem:[#allocation2 + $0xf0] sm:$0xff]
    %v123 = vld [vmem:[#allocation2 + $0xf8] sm:$0xff]
    %v156 = vunpack.c.l.b16 %v92
    %v157 = vunpack.c.h.b16 %v92
    %v158 = vunpack.c.l.b16 %v93
    %v159 = vunpack.c.h.b16 %v93
    %v160 = vunpack.c.l.b16 %v94
    %v161 = vunpack.c.h.b16 %v94
    %v162 = vunpack.c.l.b16 %v95
    %v163 = vunpack.c.h.b16 %v95
    %v164 = vunpack.c.l.b16 %v96
    %v165 = vunpack.c.h.b16 %v96
    %v166 = vunpack.c.l.b16 %v97
    %v167 = vunpack.c.h.b16 %v97
    %v168 = vunpack.c.l.b16 %v98
    %v169 = vunpack.c.h.b16 %v98
    %v170 = vunpack.c.l.b16 %v99
    %v171 = vunpack.c.h.b16 %v99
    %v172 = vunpack.c.l.b16 %v100
    %v173 = vunpack.c.h.b16 %v100
    %v174 = vunpack.c.l.b16 %v101
    %v175 = vunpack.c.h.b16 %v101
    %v176 = vunpack.c.l.b16 %v102
    %v177 = vunpack.c.h.b16 %v102
    %v178 = vunpack.c.l.b16 %v103
    %v179 = vunpack.c.h.b16 %v103
    %v180 = vunpack.c.l.b16 %v104
    %v181 = vunpack.c.h.b16 %v104
    %v182 = vunpack.c.l.b16 %v105
    %v183 = vunpack.c.h.b16 %v105
    %v184 = vunpack.c.l.b16 %v106
    %v185 = vunpack.c.h.b16 %v106
    %v186 = vunpack.c.l.b16 %v107
    %v187 = vunpack.c.h.b16 %v107
    %v188 = vunpack.c.l.b16 %v108
    %v189 = vunpack.c.h.b16 %v108
    %v190 = vunpack.c.l.b16 %v109
    %v191 = vunpack.c.h.b16 %v109
    %v192 = vunpack.c.l.b16 %v110
    %v193 = vunpack.c.h.b16 %v110
    %v194 = vunpack.c.l.b16 %v111
    %v195 = vunpack.c.h.b16 %v111
    %v196 = vunpack.c.l.b16 %v112
    %v197 = vunpack.c.h.b16 %v112
    %v198 = vunpack.c.l.b16 %v113
    %v199 = vunpack.c.h.b16 %v113
    %v200 = vunpack.c.l.b16 %v114
    %v201 = vunpack.c.h.b16 %v114
    %v202 = vunpack.c.l.b16 %v115
    %v203 = vunpack.c.h.b16 %v115
    %v204 = vunpack.c.l.b16 %v116
    %v205 = vunpack.c.h.b16 %v116
    %v206 = vunpack.c.l.b16 %v117
    %v207 = vunpack.c.h.b16 %v117
    %v208 = vunpack.c.l.b16 %v118
    %v209 = vunpack.c.h.b16 %v118
    %v210 = vunpack.c.l.b16 %v119
    %v211 = vunpack.c.h.b16 %v119
    %v212 = vunpack.c.l.b16 %v120
    %v213 = vunpack.c.h.b16 %v120
    %v214 = vunpack.c.l.b16 %v121
    %v215 = vunpack.c.h.b16 %v121
    %v216 = vunpack.c.l.b16 %v122
    %v217 = vunpack.c.h.b16 %v122
    %v218 = vunpack.c.l.b16 %v123
    %v219 = vunpack.c.h.b16 %v123
    %v220 = vpack.c.b16 %v160, %v156
    %v221 = vpack.c.b16 %v161, %v157
    %v222 = vpack.c.b16 %v162, %v158
    %v223 = vpack.c.b16 %v163, %v159
    %v224 = vpack.c.b16 %v168, %v164
    %v225 = vpack.c.b16 %v169, %v165
    %v226 = vpack.c.b16 %v170, %v166
    %v227 = vpack.c.b16 %v171, %v167
    %v228 = vpack.c.b16 %v176, %v172
    %v229 = vpack.c.b16 %v177, %v173
    %v230 = vpack.c.b16 %v178, %v174
    %v231 = vpack.c.b16 %v179, %v175
    %v232 = vpack.c.b16 %v184, %v180
    %v233 = vpack.c.b16 %v185, %v181
    %v234 = vpack.c.b16 %v186, %v182
    %v235 = vpack.c.b16 %v187, %v183
    %v236 = vpack.c.b16 %v192, %v188
    %v237 = vpack.c.b16 %v193, %v189
    %v238 = vpack.c.b16 %v194, %v190
    %v239 = vpack.c.b16 %v195, %v191
    %v240 = vpack.c.b16 %v200, %v196
    %v241 = vpack.c.b16 %v201, %v197
    %v242 = vpack.c.b16 %v202, %v198
    %v243 = vpack.c.b16 %v203, %v199
    %v244 = vpack.c.b16 %v208, %v204
    %v245 = vpack.c.b16 %v209, %v205
    %v246 = vpack.c.b16 %v210, %v206
    %v247 = vpack.c.b16 %v211, %v207
    %v248 = vpack.c.b16 %v216, %v212
    %v249 = vpack.c.b16 %v217, %v213
    %v250 = vpack.c.b16 %v218, %v214
    %v251 = vpack.c.b16 %v219, %v215
    %284 = vmatprep.subr.bf16.mxu0 %v221
    %285 = vmatpush1.bf16.msra.mxu0 %v220
    %286 = vmatprep.subr.bf16.mxu0 %v225
    %287 = vmatpush1.bf16.msra.mxu0 %v224
    %288 = vmatprep.subr.bf16.mxu0 %v229
    %289 = vmatpush1.bf16.msra.mxu0 %v228
    %290 = vmatprep.subr.bf16.mxu0 %v233
    %291 = vmatpush1.bf16.msra.mxu0 %v232
    %292 = vmatprep.subr.bf16.mxu0 %v237
    %293 = vmatpush1.bf16.msra.mxu0 %v236
    %294 = vmatprep.subr.bf16.mxu0 %v241
    %295 = vmatpush1.bf16.msra.mxu0 %v240
    %296 = vmatprep.subr.bf16.mxu0 %v245
    %297 = vmatpush1.bf16.msra.mxu0 %v244
    %298 = vmatprep.subr.bf16.mxu0 %v249
    %299 = vmatpush1.bf16.msra.mxu0 %v248
    %300 = vmatprep.subr.bf16.mxu0 0
    %301 = vmatpush1.bf16.msra.mxu0 0
    %302 = vmatprep.subr.bf16.mxu0 0
    %303 = vmatpush1.bf16.msra.mxu0 0
    %304 = vmatprep.subr.bf16.mxu0 0
    %305 = vmatpush1.bf16.msra.mxu0 0
    %306 = vmatprep.subr.bf16.mxu0 0
    %307 = vmatpush1.bf16.msra.mxu0 0
    %308 = vmatprep.subr.bf16.mxu0 0
    %309 = vmatpush1.bf16.msra.mxu0 0
    %310 = vmatprep.subr.bf16.mxu0 0
    %311 = vmatpush1.bf16.msra.mxu0 0
    %312 = vmatprep.subr.bf16.mxu0 0
    %313 = vmatpush1.bf16.msra.mxu0 0
    %314 = vmatprep.subr.bf16.mxu0 0
    %315 = vmatpush1.bf16.msra.mxu0 0
    %316 = vmatprep.mubr.bf16.mxu0 0
    %317 = vmatmul.mubr.bf16.gmra.mrb[0].mxu0 %v91
    %v318 = vpop.f32.mrb[0].mxu0
    %v319 = vadd.f32 0.0, %v318
    %v320 = vpop.f32.mrb[0].mxu0
    %v321 = vadd.f32 0.0, %v320
    %v322 = vpop.f32.mrb[0].mxu0
    %v323 = vpop.f32.mrb[0].mxu0
    %324 = vdwg.mxu0
    %325 = vmatprep.subr.bf16.mxu0 %v223
    %326 = vmatpush1.bf16.msra.mxu0 %v222
    %327 = vmatprep.subr.bf16.mxu0 %v227
    %328 = vmatpush1.bf16.msra.mxu0 %v226
    %329 = vmatprep.subr.bf16.mxu0 %v231
    %330 = vmatpush1.bf16.msra.mxu0 %v230
    %331 = vmatprep.subr.bf16.mxu0 %v235
    %332 = vmatpush1.bf16.msra.mxu0 %v234
    %333 = vmatprep.subr.bf16.mxu0 %v239
    %334 = vmatpush1.bf16.msra.mxu0 %v238
    %335 = vmatprep.subr.bf16.mxu0 %v243
    %336 = vmatpush1.bf16.msra.mxu0 %v242
    %337 = vmatprep.subr.bf16.mxu0 %v247
    %338 = vmatpush1.bf16.msra.mxu0 %v246
    %339 = vmatprep.subr.bf16.mxu0 %v251
    %340 = vmatpush1.bf16.msra.mxu0 %v250
    %341 = vmatprep.subr.bf16.mxu0 0
    %342 = vmatpush1.bf16.msra.mxu0 0
    %343 = vmatprep.subr.bf16.mxu0 0
    %344 = vmatpush1.bf16.msra.mxu0 0
    %345 = vmatprep.subr.bf16.mxu0 0
    %346 = vmatpush1.bf16.msra.mxu0 0
    %347 = vmatprep.subr.bf16.mxu0 0
    %348 = vmatpush1.bf16.msra.mxu0 0
    %349 = vmatprep.subr.bf16.mxu0 0
    %350 = vmatpush1.bf16.msra.mxu0 0
    %351 = vmatprep.subr.bf16.mxu0 0
    %352 = vmatpush1.bf16.msra.mxu0 0
    %353 = vmatprep.subr.bf16.mxu0 0
    %354 = vmatpush1.bf16.msra.mxu0 0
    %355 = vmatprep.subr.bf16.mxu0 0
    %356 = vmatpush1.bf16.msra.mxu0 0
    %357 = vmatprep.mubr.bf16.mxu0 0
    %358 = vmatmul.mubr.bf16.gmra.mrb[0].mxu0 %v91
    %v359 = vpop.f32.mrb[0].mxu0
    %v360 = vadd.f32 0.0, %v359
    %v361 = vpop.f32.mrb[0].mxu0
    %v362 = vadd.f32 0.0, %v361
    %v363 = vpop.f32.mrb[0].mxu0
    %v364 = vpop.f32.mrb[0].mxu0
    %365 = vdwg.mxu0
    %v366 = vld [vmem:[%s2] sm:$0xf]
    %v368 = vlaneseq
    %v369 = vshrl.u32 %v368, 7
    %v370 = vsub.s32 0, %v369
    %v371 = vrot.slane %v366, %v370
    %v372 = vlaneseq
    %v373 = vshrl.u32 %v372, 7
    %v374 = vsub.s32 1, %v373
    %v375 = vrot.slane %v366, %v374
    %v376 = vlaneseq
    %v377 = vshrl.u32 %v376, 7
    %v378 = vsub.s32 2, %v377
    %v379 = vrot.slane %v366, %v378
    %v380 = vlaneseq
    %v381 = vshrl.u32 %v380, 7
    %v382 = vsub.s32 3, %v381
    %v383 = vrot.slane %v366, %v382
    %v388 = vmul.f32 %v319, %v371
    %v389 = vmul.f32 %v321, %v375
    %v390 = vmul.f32 %v360, %v379
    %v391 = vmul.f32 %v362, %v383
    %v392 = vld [vmem:[%s3] sm:$0xf]
    %v394 = vlaneseq
    %v395 = vshrl.u32 %v394, 7
    %v396 = vsub.s32 0, %v395
    %v397 = vrot.slane %v392, %v396
    %v398 = vlaneseq
    %v399 = vshrl.u32 %v398, 7
    %v400 = vsub.s32 1, %v399
    %v401 = vrot.slane %v392, %v400
    %v402 = vlaneseq
    %v403 = vshrl.u32 %v402, 7
    %v404 = vsub.s32 2, %v403
    %v405 = vrot.slane %v392, %v404
    %v406 = vlaneseq
    %v407 = vshrl.u32 %v406, 7
    %v408 = vsub.s32 3, %v407
    %v409 = vrot.slane %v392, %v408
    %v414 = vadd.f32 %v388, %v397
    %v415 = vadd.f32 %v389, %v401
    %v416 = vadd.f32 %v390, %v405
    %v417 = vadd.f32 %v391, %v409
    %v418 = vmax.f32 %v414, 0.0
    %v419 = vmax.f32 %v415, 0.0
    %v420 = vmax.f32 %v416, 0.0
    %v421 = vmax.f32 %v417, 0.0
    %v422 = vpack.c.bf16 %v418, %v418
    %v423 = vpack.c.bf16 %v419, %v419
    %v424 = vpack.c.bf16 %v420, %v420
    %v425 = vpack.c.bf16 %v421, %v421
    %v426 = vld [vmem:[#allocation5] sm:$0xff]
    %v427 = vld [vmem:[#allocation5 + $0x8] sm:$0xff]
    %v428 = vld [vmem:[#allocation5 + $0x10] sm:$0xff]
    %v429 = vld [vmem:[#allocation5 + $0x18] sm:$0xff]
    %v430 = vld [vmem:[#allocation5 + $0x20] sm:$0xff]
    %v431 = vld [vmem:[#allocation5 + $0x28] sm:$0xff]
    %v432 = vld [vmem:[#allocation5 + $0x30] sm:$0xff]
    %v433 = vld [vmem:[#allocation5 + $0x38] sm:$0xff]
    %v434 = vld [vmem:[#allocation5 + $0x40] sm:$0xff]
    %v435 = vld [vmem:[#allocation5 + $0x48] sm:$0xff]
    %v436 = vld [vmem:[#allocation5 + $0x50] sm:$0xff]
    %v437 = vld [vmem:[#allocation5 + $0x58] sm:$0xff]
    %v438 = vld [vmem:[#allocation5 + $0x60] sm:$0xff]
    %v439 = vld [vmem:[#allocation5 + $0x68] sm:$0xff]
    %v440 = vld [vmem:[#allocation5 + $0x70] sm:$0xff]
    %v441 = vld [vmem:[#allocation5 + $0x78] sm:$0xff]
    %v442 = vld [vmem:[#allocation5 + $0x80] sm:$0xff]
    %v443 = vld [vmem:[#allocation5 + $0x88] sm:$0xff]
    %v444 = vld [vmem:[#allocation5 + $0x90] sm:$0xff]
    %v445 = vld [vmem:[#allocation5 + $0x98] sm:$0xff]
    %v446 = vld [vmem:[#allocation5 + $0xa0] sm:$0xff]
    %v447 = vld [vmem:[#allocation5 + $0xa8] sm:$0xff]
    %v448 = vld [vmem:[#allocation5 + $0xb0] sm:$0xff]
    %v449 = vld [vmem:[#allocation5 + $0xb8] sm:$0xff]
    %v450 = vld [vmem:[#allocation5 + $0xc0] sm:$0xff]
    %v451 = vld [vmem:[#allocation5 + $0xc8] sm:$0xff]
    %v452 = vld [vmem:[#allocation5 + $0xd0] sm:$0xff]
    %v453 = vld [vmem:[#allocation5 + $0xd8] sm:$0xff]
    %v454 = vld [vmem:[#allocation5 + $0xe0] sm:$0xff]
    %v455 = vld [vmem:[#allocation5 + $0xe8] sm:$0xff]
    %v456 = vld [vmem:[#allocation5 + $0xf0] sm:$0xff]
    %v457 = vld [vmem:[#allocation5 + $0xf8] sm:$0xff]
    %v458 = vld [vmem:[#allocation5 + $0x100] sm:$0xff]
    %v459 = vld [vmem:[#allocation5 + $0x108] sm:$0xff]
    %v460 = vld [vmem:[#allocation5 + $0x110] sm:$0xff]
    %v461 = vld [vmem:[#allocation5 + $0x118] sm:$0xff]
    %v462 = vld [vmem:[#allocation5 + $0x120] sm:$0xff]
    %v463 = vld [vmem:[#allocation5 + $0x128] sm:$0xff]
    %v464 = vld [vmem:[#allocation5 + $0x130] sm:$0xff]
    %v465 = vld [vmem:[#allocation5 + $0x138] sm:$0xff]
    %v466 = vld [vmem:[#allocation5 + $0x140] sm:$0xff]
    %v467 = vld [vmem:[#allocation5 + $0x148] sm:$0xff]
    %v468 = vld [vmem:[#allocation5 + $0x150] sm:$0xff]
    %v469 = vld [vmem:[#allocation5 + $0x158] sm:$0xff]
    %v470 = vld [vmem:[#allocation5 + $0x160] sm:$0xff]
    %v471 = vld [vmem:[#allocation5 + $0x168] sm:$0xff]
    %v472 = vld [vmem:[#allocation5 + $0x170] sm:$0xff]
    %v473 = vld [vmem:[#allocation5 + $0x178] sm:$0xff]
    %v474 = vld [vmem:[#allocation5 + $0x180] sm:$0xff]
    %v475 = vld [vmem:[#allocation5 + $0x188] sm:$0xff]
    %v476 = vld [vmem:[#allocation5 + $0x190] sm:$0xff]
    %v477 = vld [vmem:[#allocation5 + $0x198] sm:$0xff]
    %v478 = vld [vmem:[#allocation5 + $0x1a0] sm:$0xff]
    %v479 = vld [vmem:[#allocation5 + $0x1a8] sm:$0xff]
    %v480 = vld [vmem:[#allocation5 + $0x1b0] sm:$0xff]
    %v481 = vld [vmem:[#allocation5 + $0x1b8] sm:$0xff]
    %v482 = vld [vmem:[#allocation5 + $0x1c0] sm:$0xff]
    %v483 = vld [vmem:[#allocation5 + $0x1c8] sm:$0xff]
    %v484 = vld [vmem:[#allocation5 + $0x1d0] sm:$0xff]
    %v485 = vld [vmem:[#allocation5 + $0x1d8] sm:$0xff]
    %v486 = vld [vmem:[#allocation5 + $0x1e0] sm:$0xff]
    %v487 = vld [vmem:[#allocation5 + $0x1e8] sm:$0xff]
    %v488 = vld [vmem:[#allocation5 + $0x1f0] sm:$0xff]
    %v489 = vld [vmem:[#allocation5 + $0x1f8] sm:$0xff]
    %v554 = vunpack.c.l.b16 %v426
    %v555 = vunpack.c.h.b16 %v426
    %v556 = vunpack.c.l.b16 %v427
    %v557 = vunpack.c.h.b16 %v427
    %v558 = vunpack.c.l.b16 %v428
    %v559 = vunpack.c.h.b16 %v428
    %v560 = vunpack.c.l.b16 %v429
    %v561 = vunpack.c.h.b16 %v429
    %v562 = vunpack.c.l.b16 %v430
    %v563 = vunpack.c.h.b16 %v430
    %v564 = vunpack.c.l.b16 %v431
    %v565 = vunpack.c.h.b16 %v431
    %v566 = vunpack.c.l.b16 %v432
    %v567 = vunpack.c.h.b16 %v432
    %v568 = vunpack.c.l.b16 %v433
    %v569 = vunpack.c.h.b16 %v433
    %v570 = vunpack.c.l.b16 %v434
    %v571 = vunpack.c.h.b16 %v434
    %v572 = vunpack.c.l.b16 %v435
    %v573 = vunpack.c.h.b16 %v435
    %v574 = vunpack.c.l.b16 %v436
    %v575 = vunpack.c.h.b16 %v436
    %v576 = vunpack.c.l.b16 %v437
    %v577 = vunpack.c.h.b16 %v437
    %v578 = vunpack.c.l.b16 %v438
    %v579 = vunpack.c.h.b16 %v438
    %v580 = vunpack.c.l.b16 %v439
    %v581 = vunpack.c.h.b16 %v439
    %v582 = vunpack.c.l.b16 %v440
    %v583 = vunpack.c.h.b16 %v440
    %v584 = vunpack.c.l.b16 %v441
    %v585 = vunpack.c.h.b16 %v441
    %v586 = vunpack.c.l.b16 %v442
    %v587 = vunpack.c.h.b16 %v442
    %v588 = vunpack.c.l.b16 %v443
    %v589 = vunpack.c.h.b16 %v443
    %v590 = vunpack.c.l.b16 %v444
    %v591 = vunpack.c.h.b16 %v444
    %v592 = vunpack.c.l.b16 %v445
    %v593 = vunpack.c.h.b16 %v445
    %v594 = vunpack.c.l.b16 %v446
    %v595 = vunpack.c.h.b16 %v446
    %v596 = vunpack.c.l.b16 %v447
    %v597 = vunpack.c.h.b16 %v447
    %v598 = vunpack.c.l.b16 %v448
    %v599 = vunpack.c.h.b16 %v448
    %v600 = vunpack.c.l.b16 %v449
    %v601 = vunpack.c.h.b16 %v449
    %v602 = vunpack.c.l.b16 %v450
    %v603 = vunpack.c.h.b16 %v450
    %v604 = vunpack.c.l.b16 %v451
    %v605 = vunpack.c.h.b16 %v451
    %v606 = vunpack.c.l.b16 %v452
    %v607 = vunpack.c.h.b16 %v452
    %v608 = vunpack.c.l.b16 %v453
    %v609 = vunpack.c.h.b16 %v453
    %v610 = vunpack.c.l.b16 %v454
    %v611 = vunpack.c.h.b16 %v454
    %v612 = vunpack.c.l.b16 %v455
    %v613 = vunpack.c.h.b16 %v455
    %v614 = vunpack.c.l.b16 %v456
    %v615 = vunpack.c.h.b16 %v456
    %v616 = vunpack.c.l.b16 %v457
    %v617 = vunpack.c.h.b16 %v457
    %v618 = vunpack.c.l.b16 %v458
    %v619 = vunpack.c.h.b16 %v458
    %v620 = vunpack.c.l.b16 %v459
    %v621 = vunpack.c.h.b16 %v459
    %v622 = vunpack.c.l.b16 %v460
    %v623 = vunpack.c.h.b16 %v460
    %v624 = vunpack.c.l.b16 %v461
    %v625 = vunpack.c.h.b16 %v461
    %v626 = vunpack.c.l.b16 %v462
    %v627 = vunpack.c.h.b16 %v462
    %v628 = vunpack.c.l.b16 %v463
    %v629 = vunpack.c.h.b16 %v463
    %v630 = vunpack.c.l.b16 %v464
    %v631 = vunpack.c.h.b16 %v464
    %v632 = vunpack.c.l.b16 %v465
    %v633 = vunpack.c.h.b16 %v465
    %v634 = vunpack.c.l.b16 %v466
    %v635 = vunpack.c.h.b16 %v466
    %v636 = vunpack.c.l.b16 %v467
    %v637 = vunpack.c.h.b16 %v467
    %v638 = vunpack.c.l.b16 %v468
    %v639 = vunpack.c.h.b16 %v468
    %v640 = vunpack.c.l.b16 %v469
    %v641 = vunpack.c.h.b16 %v469
    %v642 = vunpack.c.l.b16 %v470
    %v643 = vunpack.c.h.b16 %v470
    %v644 = vunpack.c.l.b16 %v471
    %v645 = vunpack.c.h.b16 %v471
    %v646 = vunpack.c.l.b16 %v472
    %v647 = vunpack.c.h.b16 %v472
    %v648 = vunpack.c.l.b16 %v473
    %v649 = vunpack.c.h.b16 %v473
    %v650 = vunpack.c.l.b16 %v474
    %v651 = vunpack.c.h.b16 %v474
    %v652 = vunpack.c.l.b16 %v475
    %v653 = vunpack.c.h.b16 %v475
    %v654 = vunpack.c.l.b16 %v476
    %v655 = vunpack.c.h.b16 %v476
    %v656 = vunpack.c.l.b16 %v477
    %v657 = vunpack.c.h.b16 %v477
    %v658 = vunpack.c.l.b16 %v478
    %v659 = vunpack.c.h.b16 %v478
    %v660 = vunpack.c.l.b16 %v479
    %v661 = vunpack.c.h.b16 %v479
    %v662 = vunpack.c.l.b16 %v480
    %v663 = vunpack.c.h.b16 %v480
    %v664 = vunpack.c.l.b16 %v481
    %v665 = vunpack.c.h.b16 %v481
    %v666 = vunpack.c.l.b16 %v482
    %v667 = vunpack.c.h.b16 %v482
    %v668 = vunpack.c.l.b16 %v483
    %v669 = vunpack.c.h.b16 %v483
    %v670 = vunpack.c.l.b16 %v484
    %v671 = vunpack.c.h.b16 %v484
    %v672 = vunpack.c.l.b16 %v485
    %v673 = vunpack.c.h.b16 %v485
    %v674 = vunpack.c.l.b16 %v486
    %v675 = vunpack.c.h.b16 %v486
    %v676 = vunpack.c.l.b16 %v487
    %v677 = vunpack.c.h.b16 %v487
    %v678 = vunpack.c.l.b16 %v488
    %v679 = vunpack.c.h.b16 %v488
    %v680 = vunpack.c.l.b16 %v489
    %v681 = vunpack.c.h.b16 %v489
    %v682 = vpack.c.b16 %v556, %v554
    %v683 = vpack.c.b16 %v557, %v555
    %v684 = vpack.c.b16 %v560, %v558
    %v685 = vpack.c.b16 %v561, %v559
    %v686 = vpack.c.b16 %v564, %v562
    %v687 = vpack.c.b16 %v565, %v563
    %v688 = vpack.c.b16 %v568, %v566
    %v689 = vpack.c.b16 %v569, %v567
    %v690 = vpack.c.b16 %v572, %v570
    %v691 = vpack.c.b16 %v573, %v571
    %v692 = vpack.c.b16 %v576, %v574
    %v693 = vpack.c.b16 %v577, %v575
    %v694 = vpack.c.b16 %v580, %v578
    %v695 = vpack.c.b16 %v581, %v579
    %v696 = vpack.c.b16 %v584, %v582
    %v697 = vpack.c.b16 %v585, %v583
    %v698 = vpack.c.b16 %v588, %v586
    %v699 = vpack.c.b16 %v589, %v587
    %v700 = vpack.c.b16 %v592, %v590
    %v701 = vpack.c.b16 %v593, %v591
    %v702 = vpack.c.b16 %v596, %v594
    %v703 = vpack.c.b16 %v597, %v595
    %v704 = vpack.c.b16 %v600, %v598
    %v705 = vpack.c.b16 %v601, %v599
    %v706 = vpack.c.b16 %v604, %v602
    %v707 = vpack.c.b16 %v605, %v603
    %v708 = vpack.c.b16 %v608, %v606
    %v709 = vpack.c.b16 %v609, %v607
    %v710 = vpack.c.b16 %v612, %v610
    %v711 = vpack.c.b16 %v613, %v611
    %v712 = vpack.c.b16 %v616, %v614
    %v713 = vpack.c.b16 %v617, %v615
    %v714 = vpack.c.b16 %v620, %v618
    %v715 = vpack.c.b16 %v621, %v619
    %v716 = vpack.c.b16 %v624, %v622
    %v717 = vpack.c.b16 %v625, %v623
    %v718 = vpack.c.b16 %v628, %v626
    %v719 = vpack.c.b16 %v629, %v627
    %v720 = vpack.c.b16 %v632, %v630
    %v721 = vpack.c.b16 %v633, %v631
    %v722 = vpack.c.b16 %v636, %v634
    %v723 = vpack.c.b16 %v637, %v635
    %v724 = vpack.c.b16 %v640, %v638
    %v725 = vpack.c.b16 %v641, %v639
    %v726 = vpack.c.b16 %v644, %v642
    %v727 = vpack.c.b16 %v645, %v643
    %v728 = vpack.c.b16 %v648, %v646
    %v729 = vpack.c.b16 %v649, %v647
    %v730 = vpack.c.b16 %v652, %v650
    %v731 = vpack.c.b16 %v653, %v651
    %v732 = vpack.c.b16 %v656, %v654
    %v733 = vpack.c.b16 %v657, %v655
    %v734 = vpack.c.b16 %v660, %v658
    %v735 = vpack.c.b16 %v661, %v659
    %v736 = vpack.c.b16 %v664, %v662
    %v737 = vpack.c.b16 %v665, %v663
    %v738 = vpack.c.b16 %v668, %v666
    %v739 = vpack.c.b16 %v669, %v667
    %v740 = vpack.c.b16 %v672, %v670
    %v741 = vpack.c.b16 %v673, %v671
    %v742 = vpack.c.b16 %v676, %v674
    %v743 = vpack.c.b16 %v677, %v675
    %v744 = vpack.c.b16 %v680, %v678
    %v745 = vpack.c.b16 %v681, %v679
    %810 = vmatprep.subr.bf16.mxu0 %v683
    %811 = vmatpush1.bf16.msra.mxu0 %v682
    %812 = vmatprep.subr.bf16.mxu0 %v685
    %813 = vmatpush1.bf16.msra.mxu0 %v684
    %814 = vmatprep.subr.bf16.mxu0 %v687
    %815 = vmatpush1.bf16.msra.mxu0 %v686
    %816 = vmatprep.subr.bf16.mxu0 %v689
    %817 = vmatpush1.bf16.msra.mxu0 %v688
    %818 = vmatprep.subr.bf16.mxu0 %v691
    %819 = vmatpush1.bf16.msra.mxu0 %v690
    %820 = vmatprep.subr.bf16.mxu0 %v693
    %821 = vmatpush1.bf16.msra.mxu0 %v692
    %822 = vmatprep.subr.bf16.mxu0 %v695
    %823 = vmatpush1.bf16.msra.mxu0 %v694
    %824 = vmatprep.subr.bf16.mxu0 %v697
    %825 = vmatpush1.bf16.msra.mxu0 %v696
    %826 = vmatprep.subr.bf16.mxu0 %v699
    %827 = vmatpush1.bf16.msra.mxu0 %v698
    %828 = vmatprep.subr.bf16.mxu0 %v701
    %829 = vmatpush1.bf16.msra.mxu0 %v700
    %830 = vmatprep.subr.bf16.mxu0 %v703
    %831 = vmatpush1.bf16.msra.mxu0 %v702
    %832 = vmatprep.subr.bf16.mxu0 %v705
    %833 = vmatpush1.bf16.msra.mxu0 %v704
    %834 = vmatprep.subr.bf16.mxu0 %v707
    %835 = vmatpush1.bf16.msra.mxu0 %v706
    %836 = vmatprep.subr.bf16.mxu0 %v709
    %837 = vmatpush1.bf16.msra.mxu0 %v708
    %838 = vmatprep.subr.bf16.mxu0 %v711
    %839 = vmatpush1.bf16.msra.mxu0 %v710
    %840 = vmatprep.subr.bf16.mxu0 %v713
    %841 = vmatpush1.bf16.msra.mxu0 %v712
    %842 = vmatprep.mubr.bf16.mxu0 %v423
    %843 = vmatmul.mubr.bf16.gmra.mrb[0].mxu0 %v422
    %v844 = vpop.f32.mrb[0].mxu0
    %v845 = vadd.f32 0.0, %v844
    %v846 = vpop.f32.mrb[0].mxu0
    %v847 = vadd.f32 0.0, %v846
    %v848 = vpop.f32.mrb[0].mxu0
    %v849 = vpop.f32.mrb[0].mxu0
    %850 = vdwg.mxu0
    %851 = vmatprep.subr.bf16.mxu0 %v715
    %852 = vmatpush1.bf16.msra.mxu0 %v714
    %853 = vmatprep.subr.bf16.mxu0 %v717
    %854 = vmatpush1.bf16.msra.mxu0 %v716
    %855 = vmatprep.subr.bf16.mxu0 %v719
    %856 = vmatpush1.bf16.msra.mxu0 %v718
    %857 = vmatprep.subr.bf16.mxu0 %v721
    %858 = vmatpush1.bf16.msra.mxu0 %v720
    %859 = vmatprep.subr.bf16.mxu0 %v723
    %860 = vmatpush1.bf16.msra.mxu0 %v722
    %861 = vmatprep.subr.bf16.mxu0 %v725
    %862 = vmatpush1.bf16.msra.mxu0 %v724
    %863 = vmatprep.subr.bf16.mxu0 %v727
    %864 = vmatpush1.bf16.msra.mxu0 %v726
    %865 = vmatprep.subr.bf16.mxu0 %v729
    %866 = vmatpush1.bf16.msra.mxu0 %v728
    %867 = vmatprep.subr.bf16.mxu0 %v731
    %868 = vmatpush1.bf16.msra.mxu0 %v730
    %869 = vmatprep.subr.bf16.mxu0 %v733
    %870 = vmatpush1.bf16.msra.mxu0 %v732
    %871 = vmatprep.subr.bf16.mxu0 %v735
    %872 = vmatpush1.bf16.msra.mxu0 %v734
    %873 = vmatprep.subr.bf16.mxu0 %v737
    %874 = vmatpush1.bf16.msra.mxu0 %v736
    %875 = vmatprep.subr.bf16.mxu0 %v739
    %876 = vmatpush1.bf16.msra.mxu0 %v738
    %877 = vmatprep.subr.bf16.mxu0 %v741
    %878 = vmatpush1.bf16.msra.mxu0 %v740
    %879 = vmatprep.subr.bf16.mxu0 %v743
    %880 = vmatpush1.bf16.msra.mxu0 %v742
    %881 = vmatprep.subr.bf16.mxu0 %v745
    %882 = vmatpush1.bf16.msra.mxu0 %v744
    %883 = vmatprep.mubr.bf16.mxu0 %v425
    %884 = vmatmul.mubr.bf16.gmra.mrb[0].mxu0 %v424
    %v885 = vpop.f32.mrb[0].mxu0
    %v886 = vadd.f32 %v845, %v885
    %v887 = vpop.f32.mrb[0].mxu0
    %v888 = vadd.f32 %v847, %v887
    %v889 = vpop.f32.mrb[0].mxu0
    %v890 = vpop.f32.mrb[0].mxu0
    %891 = vdwg.mxu0
    %v892 = vld [vmem:[%s5] sm:$0x3]
    %v894 = vlaneseq
    %v895 = vshrl.u32 %v894, 7
    %v896 = vsub.s32 0, %v895
    %v897 = vrot.slane %v892, %v896
    %v898 = vlaneseq
    %v899 = vshrl.u32 %v898, 7
    %v900 = vsub.s32 1, %v899
    %v901 = vrot.slane %v892, %v900
    %v904 = vmul.f32 %v886, %v897
    %v905 = vmul.f32 %v888, %v901
    %v906 = vld [vmem:[%s6] sm:$0x3]
    %v908 = vlaneseq
    %v909 = vshrl.u32 %v908, 7
    %v910 = vsub.s32 0, %v909
    %v911 = vrot.slane %v906, %v910
    %v912 = vlaneseq
    %v913 = vshrl.u32 %v912, 7
    %v914 = vsub.s32 1, %v913
    %v915 = vrot.slane %v906, %v914
    %v918 = vadd.f32 %v904, %v911
    %v919 = vadd.f32 %v905, %v915
    %v920 = vmax.f32 %v918, 0.0
    %v921 = vmax.f32 %v919, 0.0
    %v922 = vpack.c.bf16 %v920, %v920
    %v923 = vpack.c.bf16 %v921, %v921
    %v924 = vld [vmem:[#allocation7] sm:$0xf]
    %v925 = vld [vmem:[#allocation7 + $0x4] sm:$0xf]
    %v926 = vld [vmem:[#allocation7 + $0x8] sm:$0xf]
    %v927 = vld [vmem:[#allocation7 + $0xc] sm:$0xf]
    %v928 = vld [vmem:[#allocation7 + $0x10] sm:$0xf]
    %v929 = vld [vmem:[#allocation7 + $0x14] sm:$0xf]
    %v930 = vld [vmem:[#allocation7 + $0x18] sm:$0xf]
    %v931 = vld [vmem:[#allocation7 + $0x1c] sm:$0xf]
    %v932 = vld [vmem:[#allocation7 + $0x20] sm:$0xf]
    %v933 = vld [vmem:[#allocation7 + $0x24] sm:$0xf]
    %v934 = vld [vmem:[#allocation7 + $0x28] sm:$0xf]
    %v935 = vld [vmem:[#allocation7 + $0x2c] sm:$0xf]
    %v936 = vld [vmem:[#allocation7 + $0x30] sm:$0xf]
    %v937 = vld [vmem:[#allocation7 + $0x34] sm:$0xf]
    %v938 = vld [vmem:[#allocation7 + $0x38] sm:$0xf]
    %v939 = vld [vmem:[#allocation7 + $0x3c] sm:$0xf]
    %v940 = vld [vmem:[#allocation7 + $0x40] sm:$0xf]
    %v941 = vld [vmem:[#allocation7 + $0x44] sm:$0xf]
    %v942 = vld [vmem:[#allocation7 + $0x48] sm:$0xf]
    %v943 = vld [vmem:[#allocation7 + $0x4c] sm:$0xf]
    %v944 = vld [vmem:[#allocation7 + $0x50] sm:$0xf]
    %v945 = vld [vmem:[#allocation7 + $0x54] sm:$0xf]
    %v946 = vld [vmem:[#allocation7 + $0x58] sm:$0xf]
    %v947 = vld [vmem:[#allocation7 + $0x5c] sm:$0xf]
    %v948 = vld [vmem:[#allocation7 + $0x60] sm:$0xf]
    %v949 = vld [vmem:[#allocation7 + $0x64] sm:$0xf]
    %v950 = vld [vmem:[#allocation7 + $0x68] sm:$0xf]
    %v951 = vld [vmem:[#allocation7 + $0x6c] sm:$0xf]
    %v952 = vld [vmem:[#allocation7 + $0x70] sm:$0xf]
    %v953 = vld [vmem:[#allocation7 + $0x74] sm:$0xf]
    %v954 = vld [vmem:[#allocation7 + $0x78] sm:$0xf]
    %v955 = vld [vmem:[#allocation7 + $0x7c] sm:$0xf]
    %v988 = vunpack.c.l.b16 %v924
    %v989 = vunpack.c.l.b16 %v925
    %v990 = vunpack.c.l.b16 %v926
    %v991 = vunpack.c.l.b16 %v927
    %v992 = vunpack.c.l.b16 %v928
    %v993 = vunpack.c.l.b16 %v929
    %v994 = vunpack.c.l.b16 %v930
    %v995 = vunpack.c.l.b16 %v931
    %v996 = vunpack.c.l.b16 %v932
    %v997 = vunpack.c.l.b16 %v933
    %v998 = vunpack.c.l.b16 %v934
    %v999 = vunpack.c.l.b16 %v935
    %v1000 = vunpack.c.l.b16 %v936
    %v1001 = vunpack.c.l.b16 %v937
    %v1002 = vunpack.c.l.b16 %v938
    %v1003 = vunpack.c.l.b16 %v939
    %v1004 = vunpack.c.l.b16 %v940
    %v1005 = vunpack.c.l.b16 %v941
    %v1006 = vunpack.c.l.b16 %v942
    %v1007 = vunpack.c.l.b16 %v943
    %v1008 = vunpack.c.l.b16 %v944
    %v1009 = vunpack.c.l.b16 %v945
    %v1010 = vunpack.c.l.b16 %v946
    %v1011 = vunpack.c.l.b16 %v947
    %v1012 = vunpack.c.l.b16 %v948
    %v1013 = vunpack.c.l.b16 %v949
    %v1014 = vunpack.c.l.b16 %v950
    %v1015 = vunpack.c.l.b16 %v951
    %v1016 = vunpack.c.l.b16 %v952
    %v1017 = vunpack.c.l.b16 %v953
    %v1018 = vunpack.c.l.b16 %v954
    %v1019 = vunpack.c.l.b16 %v955
    %v1020 = vpack.c.b16 %v989, %v988
    %v1021 = vpack.c.b16 %v991, %v990
    %v1022 = vpack.c.b16 %v993, %v992
    %v1023 = vpack.c.b16 %v995, %v994
    %v1024 = vpack.c.b16 %v997, %v996
    %v1025 = vpack.c.b16 %v999, %v998
    %v1026 = vpack.c.b16 %v1001, %v1000
    %v1027 = vpack.c.b16 %v1003, %v1002
    %v1028 = vpack.c.b16 %v1005, %v1004
    %v1029 = vpack.c.b16 %v1007, %v1006
    %v1030 = vpack.c.b16 %v1009, %v1008
    %v1031 = vpack.c.b16 %v1011, %v1010
    %v1032 = vpack.c.b16 %v1013, %v1012
    %v1033 = vpack.c.b16 %v1015, %v1014
    %v1034 = vpack.c.b16 %v1017, %v1016
    %v1035 = vpack.c.b16 %v1019, %v1018
    %1052 = vmatprep.subr.bf16.mxu0 0
    %1053 = vmatpush1.bf16.msra.mxu0 %v1020
    %1054 = vmatprep.subr.bf16.mxu0 0
    %1055 = vmatpush1.bf16.msra.mxu0 %v1021
    %1056 = vmatprep.subr.bf16.mxu0 0
    %1057 = vmatpush1.bf16.msra.mxu0 %v1022
    %1058 = vmatprep.subr.bf16.mxu0 0
    %1059 = vmatpush1.bf16.msra.mxu0 %v1023
    %1060 = vmatprep.subr.bf16.mxu0 0
    %1061 = vmatpush1.bf16.msra.mxu0 %v1024
    %1062 = vmatprep.subr.bf16.mxu0 0
    %1063 = vmatpush1.bf16.msra.mxu0 %v1025
    %1064 = vmatprep.subr.bf16.mxu0 0
    %1065 = vmatpush1.bf16.msra.mxu0 %v1026
    %1066 = vmatprep.subr.bf16.mxu0 0
    %1067 = vmatpush1.bf16.msra.mxu0 %v1027
    %1068 = vmatprep.subr.bf16.mxu0 0
    %1069 = vmatpush1.bf16.msra.mxu0 %v1028
    %1070 = vmatprep.subr.bf16.mxu0 0
    %1071 = vmatpush1.bf16.msra.mxu0 %v1029
    %1072 = vmatprep.subr.bf16.mxu0 0
    %1073 = vmatpush1.bf16.msra.mxu0 %v1030
    %1074 = vmatprep.subr.bf16.mxu0 0
    %1075 = vmatpush1.bf16.msra.mxu0 %v1031
    %1076 = vmatprep.subr.bf16.mxu0 0
    %1077 = vmatpush1.bf16.msra.mxu0 %v1032
    %1078 = vmatprep.subr.bf16.mxu0 0
    %1079 = vmatpush1.bf16.msra.mxu0 %v1033
    %1080 = vmatprep.subr.bf16.mxu0 0
    %1081 = vmatpush1.bf16.msra.mxu0 %v1034
    %1082 = vmatprep.subr.bf16.mxu0 0
    %1083 = vmatpush1.bf16.msra.mxu0 %v1035
    %1084 = vmatprep.mubr.bf16.mxu0 %v923
    %1085 = vmatmul.mubr.bf16.gmra.mrb[0].mxu0 %v922
    %v1086 = vpop.f32.mrb[0].mxu0
    %v1087 = vadd.f32 0.0, %v1086
    %v1088 = vpop.f32.mrb[0].mxu0
    %v1089 = vpop.f32.mrb[0].mxu0
    %v1090 = vpop.f32.mrb[0].mxu0
    %1091 = vdwg.mxu0
    %v1092 = vld [vmem:[%s8] sm:$0x1]
    %v1094 = vlaneseq
    %v1095 = vshrl.u32 %v1094, 7
    %v1096 = vsub.s32 0, %v1095
    %v1097 = vrot.slane %v1092, %v1096
    %v1099 = vmul.f32 %v1087, %v1097
    %v1100 = vld [vmem:[%s9] sm:$0x1]
    %v1102 = vlaneseq
    %v1103 = vshrl.u32 %v1102, 7
    %v1104 = vsub.s32 0, %v1103
    %v1105 = vrot.slane %v1100, %v1104
    %v1107 = vadd.f32 %v1099, %v1105
    %v1108 = vmax.f32 %v1107, 0.0
    %v1109 = vpack.c.bf16 %v1108, %v1108
    %v1110 = vld [vmem:[%s10] sm:$0xf]
    %v1111 = vld [vmem:[%s10 + $0x4] sm:$0xf]
    %v1112 = vld [vmem:[%s10 + $0x8] sm:$0xf]
    %v1113 = vld [vmem:[%s10 + $0xc] sm:$0xf]
    %v1114 = vld [vmem:[%s10 + $0x10] sm:$0xf]
    %v1115 = vld [vmem:[%s10 + $0x14] sm:$0xf]
    %v1116 = vld [vmem:[%s10 + $0x18] sm:$0xf]
    %v1117 = vld [vmem:[%s10 + $0x1c] sm:$0xf]
    %v1118 = vld [vmem:[%s10 + $0x20] sm:$0xf]
    %v1119 = vld [vmem:[%s10 + $0x24] sm:$0xf]
    %v1120 = vld [vmem:[%s10 + $0x28] sm:$0xf]
    %v1121 = vld [vmem:[%s10 + $0x2c] sm:$0xf]
    %v1122 = vld [vmem:[%s10 + $0x30] sm:$0xf]
    %v1123 = vld [vmem:[%s10 + $0x34] sm:$0xf]
    %v1124 = vld [vmem:[%s10 + $0x38] sm:$0xf]
    %v1125 = vld [vmem:[%s10 + $0x3c] sm:$0xf]
    %v1126 = vld [vmem:[%s11] sm:$0x1]
    %v1128 = vlaneseq
    %v1129 = vshrl.u32 %v1128, 7
    %v1130 = vsub.s32 0, %v1129
    %v1131 = vrot.slane %v1126, %v1130
    %v1149 = vunpack.c.l.b16 %v1110
    %v1150 = vunpack.c.l.b16 %v1111
    %v1151 = vunpack.c.l.b16 %v1112
    %v1152 = vunpack.c.l.b16 %v1113
    %v1153 = vunpack.c.l.b16 %v1114
    %v1154 = vunpack.c.l.b16 %v1115
    %v1155 = vunpack.c.l.b16 %v1116
    %v1156 = vunpack.c.l.b16 %v1117
    %v1157 = vunpack.c.l.b16 %v1118
    %v1158 = vunpack.c.l.b16 %v1119
    %v1159 = vunpack.c.l.b16 %v1120
    %v1160 = vunpack.c.l.b16 %v1121
    %v1161 = vunpack.c.l.b16 %v1122
    %v1162 = vunpack.c.l.b16 %v1123
    %v1163 = vunpack.c.l.b16 %v1124
    %v1164 = vunpack.c.l.b16 %v1125
    %v1165 = vpack.c.b16 %v1150, %v1149
    %v1166 = vpack.c.b16 %v1152, %v1151
    %v1167 = vpack.c.b16 %v1154, %v1153
    %v1168 = vpack.c.b16 %v1156, %v1155
    %v1169 = vpack.c.b16 %v1158, %v1157
    %v1170 = vpack.c.b16 %v1160, %v1159
    %v1171 = vpack.c.b16 %v1162, %v1161
    %v1172 = vpack.c.b16 %v1164, %v1163
    %1181 = vmatprep.subr.bf16.mxu0 0
    %1182 = vmatpush1.bf16.msra.mxu0 %v1165
    %1183 = vmatprep.subr.bf16.mxu0 0
    %1184 = vmatpush1.bf16.msra.mxu0 %v1166
    %1185 = vmatprep.subr.bf16.mxu0 0
    %1186 = vmatpush1.bf16.msra.mxu0 %v1167
    %1187 = vmatprep.subr.bf16.mxu0 0
    %1188 = vmatpush1.bf16.msra.mxu0 %v1168
    %1189 = vmatprep.subr.bf16.mxu0 0
    %1190 = vmatpush1.bf16.msra.mxu0 %v1169
    %1191 = vmatprep.subr.bf16.mxu0 0
    %1192 = vmatpush1.bf16.msra.mxu0 %v1170
    %1193 = vmatprep.subr.bf16.mxu0 0
    %1194 = vmatpush1.bf16.msra.mxu0 %v1171
    %1195 = vmatprep.subr.bf16.mxu0 0
    %1196 = vmatpush1.bf16.msra.mxu0 %v1172
    %1197 = vmatprep.subr.bf16.mxu0 0
    %1198 = vmatpush1.bf16.msra.mxu0 0
    %1199 = vmatprep.subr.bf16.mxu0 0
    %1200 = vmatpush1.bf16.msra.mxu0 0
    %1201 = vmatprep.subr.bf16.mxu0 0
    %1202 = vmatpush1.bf16.msra.mxu0 0
    %1203 = vmatprep.subr.bf16.mxu0 0
    %1204 = vmatpush1.bf16.msra.mxu0 0
    %1205 = vmatprep.subr.bf16.mxu0 0
    %1206 = vmatpush1.bf16.msra.mxu0 0
    %1207 = vmatprep.subr.bf16.mxu0 0
    %1208 = vmatpush1.bf16.msra.mxu0 0
    %1209 = vmatprep.subr.bf16.mxu0 0
    %1210 = vmatpush1.bf16.msra.mxu0 0
    %1211 = vmatprep.subr.bf16.mxu0 0
    %1212 = vmatpush1.bf16.msra.mxu0 0
    %1213 = vmatprep.mubr.bf16.mxu0 0
    %1214 = vmatmul.mubr.bf16.gmra.mrb[0].mxu0 %v1109
    %v1215 = vpop.f32.mrb[0].mxu0
    %v1216 = vadd.f32 %v1131, %v1215
    %v1217 = vpop.f32.mrb[0].mxu0
    %v1218 = vpop.f32.mrb[0].mxu0
    %v1219 = vpop.f32.mrb[0].mxu0
    %1220 = vdwg.mxu0
    %v1221 = vmax.f32 %v1216, 0.0
    %v1222 = vpack.c.bf16 %v1221, %v1221
    %v1223 = vld [vmem:[%s12] sm:$0xf]
    %v1224 = vld [vmem:[%s12 + $0x4] sm:$0xf]
    %v1225 = vld [vmem:[%s12 + $0x8] sm:$0xf]
    %v1226 = vld [vmem:[%s12 + $0xc] sm:$0xf]
    %v1227 = vld [vmem:[%s12 + $0x10] sm:$0xf]
    %v1228 = vld [vmem:[%s12 + $0x14] sm:$0xf]
    %v1229 = vld [vmem:[%s12 + $0x18] sm:$0xf]
    %v1230 = vld [vmem:[%s12 + $0x1c] sm:$0xf]
    %v1231 = vld [vmem:[%s13] sm:$0x1]
    %v1233 = vlaneseq
    %v1234 = vshrl.u32 %v1233, 7
    %v1235 = vsub.s32 0, %v1234
    %v1236 = vrot.slane %v1231, %v1235
    %v1246 = vunpack.c.l.b16 %v1223
    %v1247 = vunpack.c.l.b16 %v1224
    %v1248 = vunpack.c.l.b16 %v1225
    %v1249 = vunpack.c.l.b16 %v1226
    %v1250 = vunpack.c.l.b16 %v1227
    %v1251 = vunpack.c.l.b16 %v1228
    %v1252 = vunpack.c.l.b16 %v1229
    %v1253 = vunpack.c.l.b16 %v1230
    %v1254 = vpack.c.b16 %v1247, %v1246
    %v1255 = vpack.c.b16 %v1249, %v1248
    %v1256 = vpack.c.b16 %v1251, %v1250
    %v1257 = vpack.c.b16 %v1253, %v1252
    %vm1262 = vcmask 523264
    %v1264 = vsel %vm1262, %v1222, 0
    %1266 = vmatprep.subr.bf16.mxu0 0
    %1267 = vmatpush1.bf16.msra.mxu0 %v1254
    %1268 = vmatprep.subr.bf16.mxu0 0
    %1269 = vmatpush1.bf16.msra.mxu0 %v1255
    %1270 = vmatprep.subr.bf16.mxu0 0
    %1271 = vmatpush1.bf16.msra.mxu0 %v1256
    %1272 = vmatprep.subr.bf16.mxu0 0
    %1273 = vmatpush1.bf16.msra.mxu0 %v1257
    %1274 = vmatprep.subr.bf16.mxu0 0
    %1275 = vmatpush1.bf16.msra.mxu0 0
    %1276 = vmatprep.subr.bf16.mxu0 0
    %1277 = vmatpush1.bf16.msra.mxu0 0
    %1278 = vmatprep.subr.bf16.mxu0 0
    %1279 = vmatpush1.bf16.msra.mxu0 0
    %1280 = vmatprep.subr.bf16.mxu0 0
    %1281 = vmatpush1.bf16.msra.mxu0 0
    %1282 = vmatprep.subr.bf16.mxu0 0
    %1283 = vmatpush1.bf16.msra.mxu0 0
    %1284 = vmatprep.subr.bf16.mxu0 0
    %1285 = vmatpush1.bf16.msra.mxu0 0
    %1286 = vmatprep.subr.bf16.mxu0 0
    %1287 = vmatpush1.bf16.msra.mxu0 0
    %1288 = vmatprep.subr.bf16.mxu0 0
    %1289 = vmatpush1.bf16.msra.mxu0 0
    %1290 = vmatprep.subr.bf16.mxu0 0
    %1291 = vmatpush1.bf16.msra.mxu0 0
    %1292 = vmatprep.subr.bf16.mxu0 0
    %1293 = vmatpush1.bf16.msra.mxu0 0
    %1294 = vmatprep.subr.bf16.mxu0 0
    %1295 = vmatpush1.bf16.msra.mxu0 0
    %1296 = vmatprep.subr.bf16.mxu0 0
    %1297 = vmatpush1.bf16.msra.mxu0 0
    %1298 = vmatprep.mubr.bf16.mxu0 0
    %1299 = vmatmul.mubr.bf16.gmra.mrb[0].mxu0 %v1264
    %v1300 = vpop.f32.mrb[0].mxu0
    %v1301 = vadd.f32 %v1236, %v1300
    %v1302 = vpop.f32.mrb[0].mxu0
    %v1303 = vpop.f32.mrb[0].mxu0
    %v1304 = vpop.f32.mrb[0].mxu0
    %1305 = vdwg.mxu0
    %1306 = vst [vmem:[#allocation8] sm:$0xff] %v1301
    // Predicated region
    $region70: #{_forward_padded.1} parent=1 // pred_check
      _
    $region71: #{_forward_padded.1} parent=1 // pred_check_branch
      %1308 = sbr.rel (0) target = $region73
    $region72: #{_forward_padded.1} parent=1 // pred_region
      %s1310 = ssub.s32 128, 128
      %1311 = vsyncadd [#allocation4], %s1310
      %s1313 = sshll.u32 [#allocation8], 4
      %s1314 = int_to_ptr.vmem [resolvable:$true] %s1313
      %1316 = dma.vmem_to_hbm [thread:$0]  %s1314, 128, %s14, [#allocation4]
    $region73: #{_forward_padded.1} parent=1 // pred_fallthru
      _
    // Predicated region
    $region74: #{_forward_padded.1} parent=1 // pred_check
      _
    $region75: #{_forward_padded.1} parent=1 // pred_check_branch
      %1318 = sbr.rel (0) target = $region77
    $region76: #{_forward_padded.1} parent=1 // pred_region
      %1319 = dma.done [#allocation4], 128
    $region77: #{_forward_padded.1} parent=1 // pred_fallthru
      _
    %1320 = vsyncpa [#allocation3], 1
    %1321 = vsyncpa [#allocation6], 1
    %1322 = vsyncpa [#allocation4], 1

</llo_original>
